<compile_context>
chip_gen: v7x
topology: tpu7x:2x2x1
jax: 0.10.0
libtpu: 0.0.40
codegen_flags: <defaults>
</compile_context>

<pallas_src>
import functools

import jax
import jax.numpy as jnp
from jax import lax
from jax.experimental import pallas as pl
from jax.experimental.pallas import tpu as pltpu


def _lorenz_rhs(x, y, z, sigma, rho, beta):
    """The 9-FLOP Lorenz right-hand side on scalars."""
    dx = sigma * (y - x)
    dy = x * (rho - z) - y
    dz = x * y - beta * z
    return dx, dy, dz


# ----------------------------------------------------------------------------
# Kernel 1: single RHS evaluation == LorenzODE.forward(t, u)
# ----------------------------------------------------------------------------
def lorenz_rhs_kernel(params_ref, u_ref, du_ref):
    x, y, z = u_ref[0], u_ref[1], u_ref[2]
    sigma, rho, beta = params_ref[0], params_ref[1], params_ref[2]
    dx, dy, dz = _lorenz_rhs(x, y, z, sigma, rho, beta)
    du_ref[0] = dx
    du_ref[1] = dy
    du_ref[2] = dz


@jax.jit
def lorenz_ode(t, u, params):
    """Pallas equivalent of LorenzODE.forward(t, u).

    `params` is a prebuilt (3,) float32 array [sigma, rho, beta] — built once
    and reused, so no per-call stack/HBM copy.
    """
    del t  # unused, matches the PyTorch forward signature
    return pl.pallas_call(
        lorenz_rhs_kernel,
        out_shape=jax.ShapeDtypeStruct((3,), jnp.float32),
        in_specs=[
            pl.BlockSpec(memory_space=pltpu.SMEM),  # params [sigma, rho, beta]
            pl.BlockSpec(memory_space=pltpu.SMEM),  # state u = [x, y, z]
        ],
        out_specs=pl.BlockSpec(memory_space=pltpu.SMEM),
    )(params, u.astype(jnp.float32))


# ----------------------------------------------------------------------------
# Kernel 2: fused RK4 integrator — the whole time loop inside ONE pallas_call.
# Each step performs 4 RHS evals; state is carried as scalar registers through
# lax.fori_loop (zero DMA in steady state), output written once at the end.
# ----------------------------------------------------------------------------
def lorenz_rk4_kernel(params_ref, u0_ref, uT_ref, *, n_steps, dt):
    sigma, rho, beta = params_ref[0], params_ref[1], params_ref[2]
    dt_f = jnp.float32(dt)
    half = jnp.float32(0.5) * dt_f
    sixth = dt_f / jnp.float32(6.0)
    two = jnp.float32(2.0)

    def step(_, state):
        x, y, z = state
        k1x, k1y, k1z = _lorenz_rhs(x, y, z, sigma, rho, beta)
        k2x, k2y, k2z = _lorenz_rhs(
            x + half * k1x, y + half * k1y, z + half * k1z, sigma, rho, beta)
        k3x, k3y, k3z = _lorenz_rhs(
            x + half * k2x, y + half * k2y, z + half * k2z, sigma, rho, beta)
        k4x, k4y, k4z = _lorenz_rhs(
            x + dt_f * k3x, y + dt_f * k3y, z + dt_f * k3z, sigma, rho, beta)
        x = x + sixth * (k1x + two * k2x + two * k3x + k4x)
        y = y + sixth * (k1y + two * k2y + two * k3y + k4y)
        z = z + sixth * (k1z + two * k2z + two * k3z + k4z)
        return (x, y, z)

    x0, y0, z0 = u0_ref[0], u0_ref[1], u0_ref[2]
    x, y, z = lax.fori_loop(0, n_steps, step, (x0, y0, z0))
    uT_ref[0] = x
    uT_ref[1] = y
    uT_ref[2] = z


@functools.partial(jax.jit, static_argnames=("n_steps", "dt"))
def lorenz_rk4_integrate(u0, params, *, n_steps, dt):
    """Integrate the Lorenz system for n_steps of fixed-step RK4 in ONE launch."""
    return pl.pallas_call(
        functools.partial(lorenz_rk4_kernel, n_steps=n_steps, dt=dt),
        out_shape=jax.ShapeDtypeStruct((3,), jnp.float32),
        in_specs=[
            pl.BlockSpec(memory_space=pltpu.SMEM),  # params
            pl.BlockSpec(memory_space=pltpu.SMEM),  # u0
        ],
        out_specs=pl.BlockSpec(memory_space=pltpu.SMEM),
    )(params, u0.astype(jnp.float32))


if __name__ == "__main__":
    key = jax.random.PRNGKey(0)
    u = jax.random.normal(key, (3,), dtype=jnp.float32)  # state [x, y, z]
    t = jnp.float32(0.0)  # unused by forward, kept for signature parity

    # Module's __init__: sigma=[10.0], rho=21.0, beta=[8/3].
    # Params are packed ONCE (hoisted out of any solver loop).
    sigma = jnp.float32(10.0)
    rho = jnp.float32(21.0)
    beta = jnp.float32(8.0 / 3.0)
    params = jnp.array([10.0, 21.0, 8.0 / 3.0], dtype=jnp.float32)

    # --- 1) Single RHS eval: matches LorenzODE.forward(t, u) exactly. -------
    du = jax.block_until_ready(lorenz_ode(t, u, params))
    x, y, z = u[0], u[1], u[2]
    ref_du = jnp.stack([sigma * (y - x), x * (rho - z) - y, x * y - beta * z])
    assert du.shape == (3,) and du.dtype == jnp.float32
    assert jnp.allclose(du, ref_du, atol=1e-6, rtol=1e-6)

    # --- 2) Fused RK4 integrator: whole time loop inside one kernel. --------
    n_steps, dt = 200, 0.01
    uT = jax.block_until_ready(
        lorenz_rk4_integrate(u, params, n_steps=n_steps, dt=dt))

    # Plain-JAX reference RK4 (same math, outside Pallas).
    def ref_rhs(s):
        rx, ry, rz = s[0], s[1], s[2]
        return jnp.stack([sigma * (ry - rx), rx * (rho - rz) - ry,
                          rx * ry - beta * rz])

    def ref_step(_, s):
        k1 = ref_rhs(s)
        k2 = ref_rhs(s + 0.5 * dt * k1)
        k3 = ref_rhs(s + 0.5 * dt * k2)
        k4 = ref_rhs(s + dt * k3)
        return s + (dt / 6.0) * (k1 + 2.0 * k2 + 2.0 * k3 + k4)

    ref_uT = lax.fori_loop(0, n_steps, ref_step, u)
    assert uT.shape == (3,) and uT.dtype == jnp.float32
    assert jnp.allclose(uT, ref_uT, atol=1e-4, rtol=1e-4)

    print("KERNEL_OK")
</pallas_src>

<mosaic_0001>
module attributes {stable_mosaic.version = 11 : i64} {
  func.func @lorenz_rhs_kernel(%arg0: memref<3xf32, #tpu.memory_space<smem>>, %arg1: memref<3xf32, #tpu.memory_space<smem>>, %arg2: memref<3xf32, #tpu.memory_space<smem>>) attributes {dimension_semantics = [], scalar_prefetch = 0 : i64, scratch_operands = 0 : i64, tpu.core_type = #tpu.core_type<tc>} {
    %c0 = arith.constant 0 : index
    %0 = memref.load %arg1[%c0] : memref<3xf32, #tpu.memory_space<smem>>
    %c1 = arith.constant 1 : index
    %1 = memref.load %arg1[%c1] : memref<3xf32, #tpu.memory_space<smem>>
    %c2 = arith.constant 2 : index
    %2 = memref.load %arg1[%c2] : memref<3xf32, #tpu.memory_space<smem>>
    %c0_0 = arith.constant 0 : index
    %3 = memref.load %arg0[%c0_0] : memref<3xf32, #tpu.memory_space<smem>>
    %c1_1 = arith.constant 1 : index
    %4 = memref.load %arg0[%c1_1] : memref<3xf32, #tpu.memory_space<smem>>
    %c2_2 = arith.constant 2 : index
    %5 = memref.load %arg0[%c2_2] : memref<3xf32, #tpu.memory_space<smem>>
    %6 = arith.subf %1, %0 : f32
    %7 = arith.mulf %3, %6 : f32
    %8 = arith.subf %4, %2 : f32
    %9 = arith.mulf %0, %8 : f32
    %10 = arith.subf %9, %1 : f32
    %11 = arith.mulf %0, %1 : f32
    %12 = arith.mulf %5, %2 : f32
    %13 = arith.subf %11, %12 : f32
    %c0_3 = arith.constant 0 : index
    %14 = memref.load %arg2[%c0_3] : memref<3xf32, #tpu.memory_space<smem>>
    memref.store %7, %arg2[%c0_3] : memref<3xf32, #tpu.memory_space<smem>>
    %c1_4 = arith.constant 1 : index
    %15 = memref.load %arg2[%c1_4] : memref<3xf32, #tpu.memory_space<smem>>
    memref.store %10, %arg2[%c1_4] : memref<3xf32, #tpu.memory_space<smem>>
    %c2_5 = arith.constant 2 : index
    %16 = memref.load %arg2[%c2_5] : memref<3xf32, #tpu.memory_space<smem>>
    memref.store %13, %arg2[%c2_5] : memref<3xf32, #tpu.memory_space<smem>>
    return
  }
}

</mosaic_0001>

<llo_original>
// kernel: lorenz_ode.1
$region0: #{lorenz_ode.1}
  #allocation0 [shape = 'u32[]', space=smem, size = 0x4, offset = 0x4, fixed_abs, tag = 'smem constant byte address 0x4 - core index']
  #allocation1 [shape = 'u32[144,128]{1,0:T(1,128)}', space=vmem, size = 0x12000, scoped, tag = 'internal scratch']
  %s0 = inlined_call_operand.vmem [shape: f32[3], index: 0, kind: input, shape index: {}]
  %s1 = inlined_call_operand.hbm [shape: f32[3], index: 1, kind: input, shape index: {}]
  %s2 = inlined_call_operand.hbm [shape: f32[3], index: 2, kind: output, shape index: {}]
  %s3 = sld [smem:[#allocation0]]
  $region26: #{lorenz_ode.1} parent=0
    _
  %s5 = ssub.s32 1, %s3
  %s6 = scalar_select 0, %s5, %s3
  $region1: #{lorenz_ode.1} parent=0
    #allocation2 [shape = 'u8[512]{0}', space=smem, size = 0x200, scoped, tag = 'input window, operand 0, single buffered']
    #allocation3 [shape = 's32[1]{0}', space=sflag, size = 0x4, scoped, tag = 'scoped memory for lorenz_ode.1']
    #allocation4 [shape = 's32[1]{0}', space=sflag, size = 0x4, scoped, tag = 'scoped memory for lorenz_ode.1']
    #allocation5 [shape = 's32[1]{0}', space=sflag, size = 0x4, scoped, tag = 'scoped memory for lorenz_ode.1']
    #allocation6 [shape = 'u8[512]{0}', space=smem, size = 0x200, scoped, tag = 'input window, operand 1, single buffered']
    #allocation7 [shape = 'u8[512]{0}', space=smem, size = 0x200, scoped, tag = 'output window, operand 0, single buffered']
    %7 = vsyncpa [#allocation5], 0
    %8 = vsyncpa [#allocation3], 0
    %9 = vsyncpa [#allocation4], 0
    // Predicated region
    $region2: #{lorenz_ode.1} parent=1 // pred_check
      _
    $region3: #{lorenz_ode.1} parent=1 // pred_check_branch
      %11 = sbr.rel (0) target = $region5
    $region4: #{lorenz_ode.1} parent=1 // pred_region
      %s13 = ssub.s32 16, 16
      %14 = vsyncadd [#allocation5], %s13
      %s16 = sshll.u32 %s0, 4
      %s17 = int_to_ptr.vmem [resolvable:$true] %s16
      %19 = dma.vmem_to_smem %s17, 16, [#allocation2], [#allocation5]
    $region5: #{lorenz_ode.1} parent=1 // pred_fallthru
      _
    // Predicated region
    $region6: #{lorenz_ode.1} parent=1 // pred_check
      _
    $region7: #{lorenz_ode.1} parent=1 // pred_check_branch
      %21 = sbr.rel (0) target = $region9
    $region8: #{lorenz_ode.1} parent=1 // pred_region
      %s23 = ssub.s32 16, 16
      %24 = vsyncadd [#allocation3], %s23
      %27 = dma.hbm_to_smem %s1, 16, [#allocation6], [#allocation3]
    $region9: #{lorenz_ode.1} parent=1 // pred_fallthru
      _
    // Predicated region
    $region10: #{lorenz_ode.1} parent=1 // pred_check
      _
    $region11: #{lorenz_ode.1} parent=1 // pred_check_branch
      %29 = sbr.rel (0) target = $region13
    $region12: #{lorenz_ode.1} parent=1 // pred_region
      %30 = dma.done [#allocation5], 16
    $region13: #{lorenz_ode.1} parent=1 // pred_fallthru
      _
    // Predicated region
    $region14: #{lorenz_ode.1} parent=1 // pred_check
      _
    $region15: #{lorenz_ode.1} parent=1 // pred_check_branch
      %32 = sbr.rel (0) target = $region17
    $region16: #{lorenz_ode.1} parent=1 // pred_region
      %33 = dma.done [#allocation3], 16
    $region17: #{lorenz_ode.1} parent=1 // pred_fallthru
      _
    %34 = sfence
    %s35 = sld [smem:[#allocation6]]
    %s36 = sld [smem:[#allocation6 + $0x1]]
    %s37 = sld [smem:[#allocation6 + $0x2]]
    %s38 = sld [smem:[#allocation2]]
    %s39 = sld [smem:[#allocation2 + $0x1]]
    %s40 = sld [smem:[#allocation2 + $0x2]]
    %s41 = ssub.f32 %s36, %s35
    %s42 = smul.f32 %s38, %s41
    %s43 = ssub.f32 %s39, %s37
    %s44 = smul.f32 %s35, %s43
    %s45 = ssub.f32 %s44, %s36
    %s46 = smul.f32 %s35, %s36
    %s47 = smul.f32 %s40, %s37
    %s48 = ssub.f32 %s46, %s47
    %s49 = scalar_lea.smem [#allocation7], 0
    %50 = sst [smem:[%s49]] %s42
    %s51 = scalar_lea.smem [#allocation7], 1
    %52 = sst [smem:[%s51]] %s45
    %s53 = scalar_lea.smem [#allocation7], 2
    %54 = sst [smem:[%s53]] %s48
    // Predicated region
    $region18: #{lorenz_ode.1} parent=1 // pred_check
      _
    $region19: #{lorenz_ode.1} parent=1 // pred_check_branch
      %56 = sbr.rel (0) target = $region21
    $region20: #{lorenz_ode.1} parent=1 // pred_region
      %s58 = ssub.s32 16, 16
      %59 = vsyncadd [#allocation4], %s58
      %62 = dma.smem_to_hbm [#allocation7], 16, %s2, [#allocation4]
    $region21: #{lorenz_ode.1} parent=1 // pred_fallthru
      _
    // Predicated region
    $region22: #{lorenz_ode.1} parent=1 // pred_check
      _
    $region23: #{lorenz_ode.1} parent=1 // pred_check_branch
      %64 = sbr.rel (0) target = $region25
    $region24: #{lorenz_ode.1} parent=1 // pred_region
      %65 = dma.done [#allocation4], 16
    $region25: #{lorenz_ode.1} parent=1 // pred_fallthru
      _
    %66 = sfence
    %67 = vsyncpa [#allocation3], 1
    %68 = vsyncpa [#allocation4], 1
    %69 = vsyncpa [#allocation5], 1

</llo_original>
